<compile_context>
chip_gen: v6e
topology: v6e:2x2x1
jax: 0.10.0
libtpu: 0.0.40
codegen_flags: <defaults>
</compile_context>

<pallas_src>
import jax
import jax.numpy as jnp
from jax.experimental import pallas as pl
from jax.experimental.pallas import tpu as pltpu


def _round_down(v, m):
    return (v // m) * m


def _pick_hw_tile(hw, c, itemsize, requested=None):
    """Lane-dense tile size on the flattened spatial axis."""
    if hw <= 128:
        return hw                                   # single block == full extent
    target = (2 * 1024 * 1024) // (c * itemsize)    # ~2 MiB per x tile buffer
    vmem_cap = (16 * 1024 * 1024) // (2 * c * itemsize)  # double-buffer <= 16 MiB
    lanes = requested if requested is not None else target
    lanes = min(lanes, vmem_cap, hw)
    lanes = max(128, _round_down(lanes, 128))
    return min(lanes, _round_down(hw, 128))


def _make_kernel(c, hw, hw_tile, acc_w, rem, has_tail):
    n_chunks = hw_tile // acc_w
    neg_inf = float("-inf")
    inv_hw = 1.0 / float(hw)

    def _chunk(x_ref, j):
        lo = j * acc_w
        return x_ref[0, :, lo:lo + acc_w].astype(jnp.float32)   # (C, acc_w) f32

    def _acc_full(x_ref, sum_acc, max_acc):
        ps = pm = None
        for j in range(n_chunks):                     # unrolled, 128-lane aligned
            ch = _chunk(x_ref, j)
            ps = ch if ps is None else ps + ch
            pm = ch if pm is None else jnp.maximum(pm, ch)
        sum_acc[...] += ps
        max_acc[...] = jnp.maximum(max_acc[...], pm)

    def _acc_tail(x_ref, sum_acc, max_acc):
        ps = pm = None
        for j in range(n_chunks):
            lo = j * acc_w
            if lo >= rem:                             # statically skip OOB chunks
                break
            ch = _chunk(x_ref, j)
            if lo + acc_w > rem:                      # single partial chunk: select-mask
                lane = jax.lax.broadcasted_iota(jnp.int32, ch.shape, 1) + lo
                valid = lane < rem
                cs = jnp.where(valid, ch, 0.0)
                cm = jnp.where(valid, ch, neg_inf)
            else:
                cs = cm = ch
            ps = cs if ps is None else ps + cs
            pm = cm if pm is None else jnp.maximum(pm, cm)
        sum_acc[...] += ps
        max_acc[...] = jnp.maximum(max_acc[...], pm)

    def kernel(x_ref, w1_ref, w2_ref, out_ref, sum_acc, max_acc):
        # x_ref: (1, C, HW_TILE) native dtype; w1_ref: (Ch, C); w2_ref: (C, Ch)
        # out_ref: (1, C, 1) f32; sum_acc/max_acc: (C, acc_w) f32 scratch.
        t = pl.program_id(1)
        nt = pl.num_programs(1)

        @pl.when(t == 0)
        def _init():
            sum_acc[...] = jnp.zeros_like(sum_acc)
            max_acc[...] = jnp.full_like(max_acc, neg_inf)

        if has_tail:
            @pl.when(t < nt - 1)
            def _full_step():
                _acc_full(x_ref, sum_acc, max_acc)

            @pl.when(t == nt - 1)
            def _tail_step():
                _acc_tail(x_ref, sum_acc, max_acc)
        else:
            _acc_full(x_ref, sum_acc, max_acc)

        @pl.when(t == nt - 1)
        def _epilogue():
            avg = jnp.sum(sum_acc[...], axis=-1, keepdims=True) * inv_hw   # (C, 1)
            mx = jnp.max(max_acc[...], axis=-1, keepdims=True)             # (C, 1)

            def fc(p):                                                      # (C,1)->(C,1)
                h = jnp.dot(w1_ref[...], p, preferred_element_type=jnp.float32)
                h = jnp.maximum(h, 0.0)
                return jnp.dot(w2_ref[...], h, preferred_element_type=jnp.float32)

            gate = jax.nn.sigmoid(fc(avg) + fc(mx))                         # (C, 1)
            out_ref[0] = gate

    return kernel


def channel_attention(x, w1, w2, *, hw_tile=None):
    """x: (N, C, H, W); w1: (C//r, C); w2: (C, C//r). Returns (N, C, 1, 1) f32."""
    n, c, h, w = x.shape
    ch = w1.shape[0]
    hw = h * w
    itemsize = x.dtype.itemsize

    hw_tile = _pick_hw_tile(hw, c, itemsize, hw_tile)
    acc_w = min(128, hw_tile)
    n_steps = pl.cdiv(hw, hw_tile)
    rem = hw - (n_steps - 1) * hw_tile
    has_tail = (hw % hw_tile) != 0

    # Free, contiguous reshape; x keeps its native dtype (no extra HBM pass).
    x_flat = x.reshape(n, c, hw)
    w1 = w1.astype(jnp.float32)   # (Ch, C), tiny
    w2 = w2.astype(jnp.float32)   # (C, Ch), tiny

    # VMEM budget: double-buffered x tile + resident weights + lane-wide scratch.
    need = (2 * c * hw_tile * itemsize
            + 2 * 2 * c * ch * 4
            + 2 * c * acc_w * 4
            + 2 * c * 4)
    vmem_limit = int(min(40 * 1024 * 1024, max(16 * 1024 * 1024, 2 * need)))

    cost = pl.CostEstimate(
        flops=int(2 * n * c * hw + 8 * n * c * ch + 4 * n * c),
        transcendentals=int(n * c),
        bytes_accessed=int(itemsize * n * c * hw + 8 * c * ch + 4 * n * c),
    )

    out = pl.pallas_call(
        _make_kernel(c, hw, hw_tile, acc_w, rem, has_tail),
        out_shape=jax.ShapeDtypeStruct((n, c, 1), jnp.float32),
        grid_spec=pltpu.PrefetchScalarGridSpec(
            num_scalar_prefetch=0,
            grid=(n, n_steps),                                          # reduction last
            in_specs=[
                pl.BlockSpec((1, c, hw_tile), lambda i, t: (i, 0, t)),  # stream x
                pl.BlockSpec((ch, c), lambda i, t: (0, 0)),             # w1 resident
                pl.BlockSpec((c, ch), lambda i, t: (0, 0)),             # w2 resident
            ],
            out_specs=pl.BlockSpec((1, c, 1), lambda i, t: (i, 0, 0)),  # const over t
            scratch_shapes=[
                pltpu.VMEM((c, acc_w), jnp.float32),   # lane-wide running sum
                pltpu.VMEM((c, acc_w), jnp.float32),   # lane-wide running max
            ],
        ),
        compiler_params=pltpu.CompilerParams(
            dimension_semantics=("parallel", "arbitrary"),
            vmem_limit_bytes=vmem_limit,
        ),
        cost_estimate=cost,
    )(x_flat, w1, w2)

    return out.reshape(n, c, 1, 1)


def _reference(x, w1, w2):
    # Pure-JAX reference mirroring the PyTorch module (pooling in f32).
    xf = x.astype(jnp.float32)
    avg = jnp.mean(xf, axis=(2, 3))  # (N, C)
    mx = jnp.max(xf, axis=(2, 3))    # (N, C)

    def fc(p):
        return jnp.maximum(p @ w1.T, 0.0) @ w2.T

    return jax.nn.sigmoid(fc(avg) + fc(mx)).reshape(x.shape[0], x.shape[1], 1, 1)


if __name__ == "__main__":
    key = jax.random.PRNGKey(0)
    k_x1, k_x2, k_x3, k_w1, k_w2 = jax.random.split(key, 5)

    N, C, ratio = 2, 64, 8
    Ch = C // ratio

    # Deterministic synthetic weights for the two 1x1 convs (no bias).
    w1 = jax.random.normal(k_w1, (Ch, C), dtype=jnp.float32) * 0.1  # conv1: (C/r, C)
    w2 = jax.random.normal(k_w2, (C, Ch), dtype=jnp.float32) * 0.1  # conv2: (C, C/r)

    # Case 1: HW=256 -> single lane-aligned full block, no tail, one HW step.
    x1 = jax.random.normal(k_x1, (N, C, 16, 16), dtype=jnp.float32)
    o1 = jax.block_until_ready(channel_attention(x1, w1, w2))
    r1 = _reference(x1, w1, w2)
    assert o1.shape == (N, C, 1, 1)
    assert jnp.allclose(o1, r1, atol=1e-5, rtol=1e-5), float(jnp.max(jnp.abs(o1 - r1)))

    # Case 2: HW=400 with a forced small tile -> 4 HW steps + masked 16-lane tail.
    x2 = jax.random.normal(k_x2, (N, C, 20, 20), dtype=jnp.float32)
    o2 = jax.block_until_ready(channel_attention(x2, w1, w2, hw_tile=128))
    r2 = _reference(x2, w1, w2)
    assert o2.shape == (N, C, 1, 1)
    assert jnp.allclose(o2, r2, atol=1e-5, rtol=1e-5), float(jnp.max(jnp.abs(o2 - r2)))

    # Case 3: native bf16 streaming (auto tile=384 -> 2 steps, masked tail);
    # accumulation and the FC epilogue stay in f32 inside the kernel.
    x3 = jax.random.normal(k_x3, (N, C, 20, 20), dtype=jnp.float32).astype(jnp.bfloat16)
    o3 = jax.block_until_ready(channel_attention(x3, w1, w2))
    r3 = _reference(x3, w1, w2)
    assert o3.shape == (N, C, 1, 1)
    assert jnp.allclose(o3, r3, atol=1e-4, rtol=1e-4), float(jnp.max(jnp.abs(o3 - r3)))

    print("KERNEL_OK")
</pallas_src>

<mosaic_0001>
module attributes {stable_mosaic.version = 11 : i64} {
  func.func @kernel(%arg0: i32, %arg1: i32, %arg2: memref<1x64x256xf32, #tpu.memory_space<vmem>>, %arg3: memref<8x64xf32, #tpu.memory_space<vmem>>, %arg4: memref<64x8xf32, #tpu.memory_space<vmem>>, %arg5: memref<1x64x1xf32, #tpu.memory_space<vmem>>, %arg6: memref<64x128xf32, #tpu.memory_space<vmem>>, %arg7: memref<64x128xf32, #tpu.memory_space<vmem>>) attributes {dimension_semantics = [#tpu.dimension_semantics<parallel>, #tpu.dimension_semantics<arbitrary>], iteration_bounds = array<i64: 2, 1>, scalar_prefetch = 0 : i64, scratch_operands = 2 : i64, tpu.core_type = #tpu.core_type<tc>, window_params = [{transform_indices = @transform_0, window_bounds = array<i64: 1, 64, 256>}, {pipeline_mode = #tpu.pipeline_mode<synchronous>, transform_indices = @transform_1, window_bounds = array<i64: 8, 64>}, {pipeline_mode = #tpu.pipeline_mode<synchronous>, transform_indices = @transform_2, window_bounds = array<i64: 64, 8>}, {transform_indices = @transform_3, window_bounds = array<i64: 1, 64, 1>}]} {
    %c0_i32 = arith.constant 0 : i32
    %0 = arith.cmpi eq, %arg1, %c0_i32 : i32
    %1 = arith.extui %0 : i1 to i32
    %c0_i32_0 = arith.constant 0 : i32
    %2 = arith.cmpi ne, %1, %c0_i32_0 : i32
    scf.if %2 {
      %cst = arith.constant 0.000000e+00 : f32
      %18 = vector.broadcast %cst : f32 to vector<64x128xf32>
      %c0_15 = arith.constant 0 : index
      %c0_16 = arith.constant 0 : index
      %19 = vector.load %arg6[%c0_15, %c0_16] : memref<64x128xf32, #tpu.memory_space<vmem>>, vector<64x128xf32>
      tpu.vector_store %arg6[%c0_15, %c0_16], %18 {strides = array<i32>} : memref<64x128xf32, #tpu.memory_space<vmem>>, vector<64x128xf32>,
      %cst_17 = arith.constant 0xFF800000 : f32
      %20 = vector.broadcast %cst_17 : f32 to vector<64x128xf32>
      %c0_18 = arith.constant 0 : index
      %c0_19 = arith.constant 0 : index
      %21 = vector.load %arg7[%c0_18, %c0_19] : memref<64x128xf32, #tpu.memory_space<vmem>>, vector<64x128xf32>
      tpu.vector_store %arg7[%c0_18, %c0_19], %20 {strides = array<i32>} : memref<64x128xf32, #tpu.memory_space<vmem>>, vector<64x128xf32>,
    } else {
    }
    %c0 = arith.constant 0 : index
    %c0_1 = arith.constant 0 : index
    %c0_2 = arith.constant 0 : index
    %3 = vector.load %arg2[%c0, %c0_1, %c0_2] : memref<1x64x256xf32, #tpu.memory_space<vmem>>, vector<1x64x128xf32>
    %4 = vector.shape_cast %3 : vector<1x64x128xf32> to vector<64x128xf32>
    %c0_3 = arith.constant 0 : index
    %c0_4 = arith.constant 0 : index
    %c128 = arith.constant 128 : index
    %5 = vector.load %arg2[%c0_3, %c0_4, %c128] : memref<1x64x256xf32, #tpu.memory_space<vmem>>, vector<1x64x128xf32>
    %6 = vector.shape_cast %5 : vector<1x64x128xf32> to vector<64x128xf32>
    %7 = arith.addf %4, %6 : vector<64x128xf32>
    %8 = arith.maximumf %4, %6 : vector<64x128xf32>
    %c0_5 = arith.constant 0 : index
    %c0_6 = arith.constant 0 : index
    %9 = vector.load %arg6[%c0_5, %c0_6] : memref<64x128xf32, #tpu.memory_space<vmem>>, vector<64x128xf32>
    %10 = arith.addf %9, %7 : vector<64x128xf32>
    %c0_7 = arith.constant 0 : index
    %c0_8 = arith.constant 0 : index
    %11 = vector.load %arg6[%c0_7, %c0_8] : memref<64x128xf32, #tpu.memory_space<vmem>>, vector<64x128xf32>
    tpu.vector_store %arg6[%c0_7, %c0_8], %10 {strides = array<i32>} : memref<64x128xf32, #tpu.memory_space<vmem>>, vector<64x128xf32>,
    %c0_9 = arith.constant 0 : index
    %c0_10 = arith.constant 0 : index
    %12 = vector.load %arg7[%c0_9, %c0_10] : memref<64x128xf32, #tpu.memory_space<vmem>>, vector<64x128xf32>
    %13 = arith.maximumf %12, %8 : vector<64x128xf32>
    %c0_11 = arith.constant 0 : index
    %c0_12 = arith.constant 0 : index
    %14 = vector.load %arg7[%c0_11, %c0_12] : memref<64x128xf32, #tpu.memory_space<vmem>>, vector<64x128xf32>
    tpu.vector_store %arg7[%c0_11, %c0_12], %13 {strides = array<i32>} : memref<64x128xf32, #tpu.memory_space<vmem>>, vector<64x128xf32>,
    %c0_i32_13 = arith.constant 0 : i32
    %15 = arith.cmpi eq, %arg1, %c0_i32_13 : i32
    %16 = arith.extui %15 : i1 to i32
    %c0_i32_14 = arith.constant 0 : i32
    %17 = arith.cmpi ne, %16, %c0_i32_14 : i32
    scf.if %17 {
      %c0_15 = arith.constant 0 : index
      %c0_16 = arith.constant 0 : index
      %18 = vector.load %arg6[%c0_15, %c0_16] : memref<64x128xf32, #tpu.memory_space<vmem>>, vector<64x128xf32>
      %cst = arith.constant dense<0.000000e+00> : vector<64xf32>
      %19 = vector.multi_reduction <add>, %18, %cst [1] : vector<64x128xf32> to vector<64xf32>
      %20 = vector.shape_cast %19 : vector<64xf32> to vector<64x1xf32>
      %cst_17 = arith.constant 3.906250e-03 : f32
      %21 = vector.broadcast %cst_17 : f32 to vector<64x1xf32>
      %22 = arith.mulf %20, %21 : vector<64x1xf32>
      %c0_18 = arith.constant 0 : index
      %c0_19 = arith.constant 0 : index
      %23 = vector.load %arg7[%c0_18, %c0_19] : memref<64x128xf32, #tpu.memory_space<vmem>>, vector<64x128xf32>
      %cst_20 = arith.constant dense<0xFF800000> : vector<64xf32>
      %24 = vector.multi_reduction <maximumf>, %23, %cst_20 [1] : vector<64x128xf32> to vector<64xf32>
      %25 = vector.shape_cast %24 : vector<64xf32> to vector<64x1xf32>
      %c0_21 = arith.constant 0 : index
      %c0_22 = arith.constant 0 : index
      %26 = vector.load %arg3[%c0_21, %c0_22] : memref<8x64xf32, #tpu.memory_space<vmem>>, vector<8x64xf32>
      %cst_23 = arith.constant dense<0.000000e+00> : vector<8x1xf32>
      %27 = tpu.matmul %26, %22, %cst_23 {dimension_numbers = #tpu.dot_dimension_numbers<[1], [0], [0], [1], [0, 0, 1, 1], [], []>} : vector<8x64xf32>, vector<64x1xf32>, vector<8x1xf32> -> vector<8x1xf32>
      %cst_24 = arith.constant 0.000000e+00 : f32
      %28 = vector.broadcast %cst_24 : f32 to vector<8x1xf32>
      %29 = arith.maximumf %27, %28 : vector<8x1xf32>
      %c0_25 = arith.constant 0 : index
      %c0_26 = arith.constant 0 : index
      %30 = vector.load %arg4[%c0_25, %c0_26] : memref<64x8xf32, #tpu.memory_space<vmem>>, vector<64x8xf32>
      %cst_27 = arith.constant dense<0.000000e+00> : vector<64x1xf32>
      %31 = tpu.matmul %30, %29, %cst_27 {dimension_numbers = #tpu.dot_dimension_numbers<[1], [0], [0], [1], [0, 0, 1, 1], [], []>} : vector<64x8xf32>, vector<8x1xf32>, vector<64x1xf32> -> vector<64x1xf32>
      %c0_28 = arith.constant 0 : index
      %c0_29 = arith.constant 0 : index
      %32 = vector.load %arg3[%c0_28, %c0_29] : memref<8x64xf32, #tpu.memory_space<vmem>>, vector<8x64xf32>
      %cst_30 = arith.constant dense<0.000000e+00> : vector<8x1xf32>
      %33 = tpu.matmul %32, %25, %cst_30 {dimension_numbers = #tpu.dot_dimension_numbers<[1], [0], [0], [1], [0, 0, 1, 1], [], []>} : vector<8x64xf32>, vector<64x1xf32>, vector<8x1xf32> -> vector<8x1xf32>
      %cst_31 = arith.constant 0.000000e+00 : f32
      %34 = vector.broadcast %cst_31 : f32 to vector<8x1xf32>
      %35 = arith.maximumf %33, %34 : vector<8x1xf32>
      %c0_32 = arith.constant 0 : index
      %c0_33 = arith.constant 0 : index
      %36 = vector.load %arg4[%c0_32, %c0_33] : memref<64x8xf32, #tpu.memory_space<vmem>>, vector<64x8xf32>
      %cst_34 = arith.constant dense<0.000000e+00> : vector<64x1xf32>
      %37 = tpu.matmul %36, %35, %cst_34 {dimension_numbers = #tpu.dot_dimension_numbers<[1], [0], [0], [1], [0, 0, 1, 1], [], []>} : vector<64x8xf32>, vector<8x1xf32>, vector<64x1xf32> -> vector<64x1xf32>
      %38 = arith.addf %31, %37 : vector<64x1xf32>
      %39 = arith.negf %38 : vector<64x1xf32>
      %40 = math.exp %39 : vector<64x1xf32>
      %cst_35 = arith.constant 1.000000e+00 : f32
      %41 = vector.broadcast %cst_35 : f32 to vector<64x1xf32>
      %42 = arith.addf %41, %40 : vector<64x1xf32>
      %43 = arith.divf %41, %42 : vector<64x1xf32>
      %c0_36 = arith.constant 0 : index
      %c0_37 = arith.constant 0 : index
      %c0_38 = arith.constant 0 : index
      %44 = vector.load %arg5[%c0_36, %c0_37, %c0_38] : memref<1x64x1xf32, #tpu.memory_space<vmem>>, vector<1x64x1xf32>
      %45 = vector.shape_cast %44 : vector<1x64x1xf32> to vector<64x1xf32>
      %46 = vector.shape_cast %43 : vector<64x1xf32> to vector<1x64x1xf32>
      tpu.vector_store %arg5[%c0_36, %c0_37, %c0_38], %46 {strides = array<i32>} : memref<1x64x1xf32, #tpu.memory_space<vmem>>, vector<1x64x1xf32>,
    } else {
    }
    return
  }
  func.func @transform_0(%arg0: i32, %arg1: i32) -> (i32, i32, i32) {
    %c0_i32 = arith.constant 0 : i32
    %c0_i32_0 = arith.constant 0 : i32
    return %arg0, %c0_i32, %arg1 : i32, i32, i32
  }
  func.func @transform_1(%arg0: i32, %arg1: i32) -> (i32, i32) {
    %c0_i32 = arith.constant 0 : i32
    %c0_i32_0 = arith.constant 0 : i32
    %c0_i32_1 = arith.constant 0 : i32
    return %c0_i32, %c0_i32_0 : i32, i32
  }
  func.func @transform_2(%arg0: i32, %arg1: i32) -> (i32, i32) {
    %c0_i32 = arith.constant 0 : i32
    %c0_i32_0 = arith.constant 0 : i32
    %c0_i32_1 = arith.constant 0 : i32
    return %c0_i32, %c0_i32_0 : i32, i32
  }
  func.func @transform_3(%arg0: i32, %arg1: i32) -> (i32, i32, i32) {
    %c0_i32 = arith.constant 0 : i32
    %c0_i32_0 = arith.constant 0 : i32
    %c0_i32_1 = arith.constant 0 : i32
    return %arg0, %c0_i32, %c0_i32_0 : i32, i32, i32
  }
}

</mosaic_0001>

<llo_original>
// kernel: tpu_custom_call.1
$region0: #{tpu_custom_call.1}
  #allocation0 [shape = 'u32[]', space=smem, size = 0x4, offset = 0x4, fixed_abs, tag = 'smem constant byte address 0x4 - core index']
  #allocation1 [shape = 'u32[144,128]{1,0:T(1,128)}', space=vmem, size = 0x12000, scoped, tag = 'internal scratch']
  #allocation2 [shape = 'f32[64,128]{1,0:T(8,128)}', space=vmem, size = 0x8000, scoped, tag = 'scratch operand']
  #allocation3 [shape = 'f32[64,128]{1,0:T(8,128)}', space=vmem, size = 0x8000, scoped, tag = 'scratch operand']
  %s0 = inlined_call_operand.hbm [shape: f32[2,64,256], index: 0, kind: input, shape index: {}]
  %s1 = inlined_call_operand.vmem [shape: f32[8,64], index: 1, kind: input, shape index: {}]
  %s2 = inlined_call_operand.vmem [shape: f32[64,8], index: 2, kind: input, shape index: {}]
  %s3 = inlined_call_operand.vmem [shape: f32[2,64,1], index: 3, kind: output, shape index: {}]
  %s4 = sld [smem:[#allocation0]]
  $region57: #{tpu_custom_call.1} parent=0
    _
  %s6 = ssub.s32 1, %s4
  %s7 = scalar_select 0, %s6, %s4
  $region1: #{tpu_custom_call.1} parent=0
    #allocation4 [shape = 'u8[131072]{0}', space=vmem, size = 0x20000, scoped, tag = 'input window, operand 0']
    #allocation5 [shape = 's32[2]{0}', space=sflag, size = 0x8, scoped, tag = 'scoped memory for tpu_custom_call.1']
    %8 = vsyncpa [#allocation5], 0
    %s9 = scalar_lea.sflag [#allocation5], 1
    %10 = vsyncpa %s9, 0
    loop: start=0, step=1, limit=4
    $region2: #{tpu_custom_call.1} parent=1 // loop_pre_header
      _
    $region3: #{tpu_custom_call.1} parent=1 // loop_header
      %s12 = sphi 0, %s16
      %p13 = scmp.ge.s32.totalorder %s12, 4
      %s19 = sphi 0, %s31
      %s20 = sphi 0, %s27
      %s21 = sphi 0, %s19
      %s22 = sphi 0, %s20
      %s23 = sphi 0, %s21
      %s24 = sphi 0, %s22
      %s36 = sphi 0, %s38
      %s39 = sphi 0, %s36
      %s40 = sphi 0, %s39
      %s56 = sphi 0, %s40
      %s60 = sphi 0, %s60
      %s62 = sphi 0, %s60
      %s63 = sphi 0, %s62
      %s77 = sphi 0, %s63
      %s81 = sphi 0, %s81
      %s83 = sphi 0, %s81
      %s84 = sphi 0, %s83
      %s98 = sphi 0, %s84
      %s104 = sphi 0, %s106
      %s107 = sphi 0, %s104
      %s108 = sphi 0, %s107
      %s124 = sphi 0, %s108
    $region4: #{tpu_custom_call.1} parent=1 // loop_header_branch
      %15 = sbr.rel (%p13) target = $region8
    $region5: #{tpu_custom_call.1} parent=1 // loop_body
      %s17 = ssub.s32 %s12, 1
      %s18 = ssub.s32 %s12, 2
      %s25 = sadd.s32 1, %s20
      %p26 = scmp.ge.s32.totalorder %s25, 1
      %s27 = scalar_select %p26, 0, %s25
      %s28 = sadd.s32 1, %s19
      %s29 = scalar_select %p26, %s28, %s19
      %p30 = scmp.ge.s32.totalorder %s29, 2
      %s31 = scalar_select %p30, 0, %s29
      %s32 = ssub.s32 %s19, %s31
      %s33 = ssub.s32 %s20, %s27
      %s34 = sor.u32 %s32, %s33
      %p35 = scmp.eq.s32.totalorder %s34, 0
      %s37 = sadd.s32 %s36, 1
      %s38 = scalar_select %p35, %s36, %s37
      %p41 = pneg %p35
      %p42 = scmp.eq.s32.totalorder %s12, 1
      %p43 = por %p41, %p42
      %p44 = scmp.ne.s32.totalorder %s36, %s39
      %p45 = scmp.eq.s32.totalorder %s12, 0
      %p46 = por %p44, %p45
      %p47 = scmp.ne.s32.totalorder %s36, %s39
      %p48 = scmp.eq.s32.totalorder %s17, 1
      %p49 = por %p47, %p48
      %p50 = scmp.ne.s32.totalorder %s39, %s40
      %p51 = scmp.eq.s32.totalorder %s17, 0
      %p52 = por %p50, %p51
      %p53 = scmp.ne.s32.totalorder %s39, %s40
      %p54 = scmp.eq.s32.totalorder %s18, 1
      %p55 = por %p53, %p54
      %p57 = scmp.ne.s32.totalorder %s40, %s56
      %p58 = scmp.eq.s32.totalorder %s18, 0
      %p59 = por %p57, %p58
      %s61 = sadd.s32 %s60, 1
      %p64 = scmp.eq.s32.totalorder %s12, 1
      %p65 = scmp.ne.s32.totalorder %s60, %s62
      %p66 = scmp.eq.s32.totalorder %s12, 0
      %p67 = por %p65, %p66
      %p68 = scmp.ne.s32.totalorder %s60, %s62
      %p69 = scmp.eq.s32.totalorder %s17, 1
      %p70 = por %p68, %p69
      %p71 = scmp.ne.s32.totalorder %s62, %s63
      %p72 = scmp.eq.s32.totalorder %s17, 0
      %p73 = por %p71, %p72
      %p74 = scmp.ne.s32.totalorder %s62, %s63
      %p75 = scmp.eq.s32.totalorder %s18, 1
      %p76 = por %p74, %p75
      %p78 = scmp.ne.s32.totalorder %s63, %s77
      %p79 = scmp.eq.s32.totalorder %s18, 0
      %p80 = por %p78, %p79
      %s82 = sadd.s32 %s81, 1
      %p85 = scmp.eq.s32.totalorder %s12, 1
      %p86 = scmp.ne.s32.totalorder %s81, %s83
      %p87 = scmp.eq.s32.totalorder %s12, 0
      %p88 = por %p86, %p87
      %p89 = scmp.ne.s32.totalorder %s81, %s83
      %p90 = scmp.eq.s32.totalorder %s17, 1
      %p91 = por %p89, %p90
      %p92 = scmp.ne.s32.totalorder %s83, %s84
      %p93 = scmp.eq.s32.totalorder %s17, 0
      %p94 = por %p92, %p93
      %p95 = scmp.ne.s32.totalorder %s83, %s84
      %p96 = scmp.eq.s32.totalorder %s18, 1
      %p97 = por %p95, %p96
      %p99 = scmp.ne.s32.totalorder %s84, %s98
      %p100 = scmp.eq.s32.totalorder %s18, 0
      %p101 = por %p99, %p100
      %s102 = ssub.s32 %s19, %s31
      %p103 = scmp.eq.s32.totalorder %s102, 0
      %s105 = sadd.s32 %s104, 1
      %s106 = scalar_select %p103, %s104, %s105
      %p109 = pneg %p103
      %p110 = scmp.eq.s32.totalorder %s12, 1
      %p111 = por %p109, %p110
      %p112 = scmp.ne.s32.totalorder %s104, %s107
      %p113 = scmp.eq.s32.totalorder %s12, 0
      %p114 = por %p112, %p113
      %p115 = scmp.ne.s32.totalorder %s104, %s107
      %p116 = scmp.eq.s32.totalorder %s17, 1
      %p117 = por %p115, %p116
      %p118 = scmp.ne.s32.totalorder %s107, %s108
      %p119 = scmp.eq.s32.totalorder %s17, 0
      %p120 = por %p118, %p119
      %p121 = scmp.ne.s32.totalorder %s107, %s108
      %p122 = scmp.eq.s32.totalorder %s18, 1
      %p123 = por %p121, %p122
      %p125 = scmp.ne.s32.totalorder %s108, %s124
      %p126 = scmp.eq.s32.totalorder %s18, 0
      %p127 = por %p125, %p126
      %p128 = scmp.le.s32.totalorder 1, %s12
      %p129 = scmp.lt.s32.totalorder %s12, 3
      %p130 = pnand %p128, %p129
      %p131 = pneg %p130
      // Predicated region
      $region9: #{tpu_custom_call.1} parent=5 // pred_check
        _
      $region10: #{tpu_custom_call.1} parent=5 // pred_check_branch
        %133 = sbr.rel (%p130) target = $region12
      $region11: #{tpu_custom_call.1} parent=5 // pred_region
        %s134 = ssub.s32 %s12, 1
        // Predicated region
        $region13: #{tpu_custom_call.1} parent=11 // pred_check
          %p135 = pneg %p73
        $region14: #{tpu_custom_call.1} parent=11 // pred_check_branch
          %137 = sbr.rel (%p135) target = $region16
        $region15: #{tpu_custom_call.1} parent=11 // pred_region
          _
        $region16: #{tpu_custom_call.1} parent=11 // pred_fallthru
          _
        // Predicated region
        $region17: #{tpu_custom_call.1} parent=11 // pred_check
          %p138 = pneg %p94
        $region18: #{tpu_custom_call.1} parent=11 // pred_check_branch
          %140 = sbr.rel (%p138) target = $region20
        $region19: #{tpu_custom_call.1} parent=11 // pred_region
          _
        $region20: #{tpu_custom_call.1} parent=11 // pred_fallthru
          _
      $region12: #{tpu_custom_call.1} parent=5 // pred_fallthru
        _
      %p141 = scmp.lt.s32.totalorder %s12, 2
      // Predicated region
      $region21: #{tpu_custom_call.1} parent=5 // pred_check
        %p142 = pneg %p141
      $region22: #{tpu_custom_call.1} parent=5 // pred_check_branch
        %144 = sbr.rel (%p142) target = $region24
      $region23: #{tpu_custom_call.1} parent=5 // pred_region
        // Predicated region
        $region25: #{tpu_custom_call.1} parent=23 // pred_check
          %p145 = pneg %p46
        $region26: #{tpu_custom_call.1} parent=23 // pred_check_branch
          %147 = sbr.rel (%p145) target = $region28
        $region27: #{tpu_custom_call.1} parent=23 // pred_region
          %s148 = sand.u32 %s36, 1
          %s149 = scalar_lea.sflag [#allocation5], %s148
          %s150 = sand.u32 %s36, 1
          %s151 = smul.addr %s150, 128
          %s152 = scalar_lea.vmem [#allocation4], %s151
          %s153 = smul.u32 2, %s20
          %s155 = ssub.s32 2048, 2048
          %156 = vsyncadd %s149, %s155
          %s157 = smul.addr %s19, 16
          %s158 = sadd.s32 %s153, %s157
          %s159 = smul.addr %s158, 128
          %s160 = scalar_lea.hbm %s0, %s159
          %s161 = sshll.u32 %s152, 4
          %s162 = int_to_ptr.vmem [resolvable:$true] %s161
          %167 = dma.hbm_to_vmem [thread:$0]  %s160, 2048, %s162, %s149, 256, 256, 16
        $region28: #{tpu_custom_call.1} parent=23 // pred_fallthru
          _
      $region24: #{tpu_custom_call.1} parent=5 // pred_fallthru
        _
      %p168 = scmp.le.s32.totalorder 1, %s12
      %p169 = scmp.lt.s32.totalorder %s12, 3
      %p170 = pnand %p168, %p169
      %p171 = pneg %p170
      // Predicated region
      $region29: #{tpu_custom_call.1} parent=5 // pred_check
        _
      $region30: #{tpu_custom_call.1} parent=5 // pred_check_branch
        %173 = sbr.rel (%p170) target = $region32
      $region31: #{tpu_custom_call.1} parent=5 // pred_region
        %s174 = ssub.s32 %s12, 1
        %s175 = sand.u32 %s39, 1
        %s176 = scalar_lea.sflag [#allocation5], %s175
        %s177 = sand.u32 %s39, 1
        %s178 = smul.addr %s177, 128
        %s179 = scalar_lea.vmem [#allocation4], %s178
        // Predicated region
        $region33: #{tpu_custom_call.1} parent=31 // pred_check
          %p180 = pneg %p52
        $region34: #{tpu_custom_call.1} parent=31 // pred_check_branch
          %182 = sbr.rel (%p180) target = $region36
        $region35: #{tpu_custom_call.1} parent=31 // pred_region
          %183 = dma.done %s176, 2048
        $region36: #{tpu_custom_call.1} parent=31 // pred_fallthru
          _
        %s184 = sand.u32 %s39, 1
        %s185 = scalar_lea.sflag [#allocation5], %s184
        %s186 = sand.u32 %s39, 1
        %s187 = smul.addr %s186, 128
        %s188 = scalar_lea.vmem [#allocation4], %s187
        %p189 = pneg %p52
        %p190 = pneg %p49
        %p191 = pneg %p73
        %p192 = pneg %p70
        %p193 = pneg %p94
        %p194 = pneg %p91
        %p195 = pneg %p120
        %p196 = pneg %p117
        %p197 = scmp.lt.s32.totalorder %s21, 1
        %s198 = scalar_select %p197, %s21, 1
        %s199 = smul.addr %s198, 8
        %s200 = smul.addr %s199, 8
        %s201 = scalar_lea.vmem %s3, %s200
        %s202 = smul.u32 2, %s22
        %p203 = scmp.lt.s32.totalorder %s21, 1
        %s204 = scalar_select %p203, %s21, 1
        %s205 = smul.addr %s204, 8
        %s206 = smul.addr %s205, 8
        %s207 = scalar_lea.vmem %s3, %s206
        %p208 = scmp.eq.s32.totalorder %s22, 0
        // Predicated region
        $region37: #{tpu_custom_call.1} parent=31 // pred_check
          %p209 = pneg %p208
        $region38: #{tpu_custom_call.1} parent=31 // pred_check_branch
          %211 = sbr.rel (%p209) target = $region40
        $region39: #{tpu_custom_call.1} parent=31 // pred_region
          %212 = vst [vmem:[#allocation2] sm:$0xff] 0.0
          %213 = vst [vmem:[#allocation2 + $0x8] sm:$0xff] 0.0
          %214 = vst [vmem:[#allocation2 + $0x10] sm:$0xff] 0.0
          %215 = vst [vmem:[#allocation2 + $0x18] sm:$0xff] 0.0
          %216 = vst [vmem:[#allocation2 + $0x20] sm:$0xff] 0.0
          %217 = vst [vmem:[#allocation2 + $0x28] sm:$0xff] 0.0
          %218 = vst [vmem:[#allocation2 + $0x30] sm:$0xff] 0.0
          %219 = vst [vmem:[#allocation2 + $0x38] sm:$0xff] 0.0
          %220 = vst [vmem:[#allocation3] sm:$0xff] -inf
          %221 = vst [vmem:[#allocation3 + $0x8] sm:$0xff] -inf
          %222 = vst [vmem:[#allocation3 + $0x10] sm:$0xff] -inf
          %223 = vst [vmem:[#allocation3 + $0x18] sm:$0xff] -inf
          %224 = vst [vmem:[#allocation3 + $0x20] sm:$0xff] -inf
          %225 = vst [vmem:[#allocation3 + $0x28] sm:$0xff] -inf
          %226 = vst [vmem:[#allocation3 + $0x30] sm:$0xff] -inf
          %227 = vst [vmem:[#allocation3 + $0x38] sm:$0xff] -inf
        $region40: #{tpu_custom_call.1} parent=31 // pred_fallthru
          _
        %v228 = vld [vmem:[%s179] sm:$0xff]
        %v229 = vld [vmem:[%s179 + $0x10] sm:$0xff]
        %v230 = vld [vmem:[%s179 + $0x20] sm:$0xff]
        %v231 = vld [vmem:[%s179 + $0x30] sm:$0xff]
        %v232 = vld [vmem:[%s179 + $0x40] sm:$0xff]
        %v233 = vld [vmem:[%s179 + $0x50] sm:$0xff]
        %v234 = vld [vmem:[%s179 + $0x60] sm:$0xff]
        %v235 = vld [vmem:[%s179 + $0x70] sm:$0xff]
        %v236 = vld [vmem:[%s179 + $0x8] sm:$0xff]
        %v237 = vld [vmem:[%s179 + $0x18] sm:$0xff]
        %v238 = vld [vmem:[%s179 + $0x28] sm:$0xff]
        %v239 = vld [vmem:[%s179 + $0x38] sm:$0xff]
        %v240 = vld [vmem:[%s179 + $0x48] sm:$0xff]
        %v241 = vld [vmem:[%s179 + $0x58] sm:$0xff]
        %v242 = vld [vmem:[%s179 + $0x68] sm:$0xff]
        %v243 = vld [vmem:[%s179 + $0x78] sm:$0xff]
        %v244 = vadd.f32 %v228, %v236
        %v245 = vadd.f32 %v229, %v237
        %v246 = vadd.f32 %v230, %v238
        %v247 = vadd.f32 %v231, %v239
        %v248 = vadd.f32 %v232, %v240
        %v249 = vadd.f32 %v233, %v241
        %v250 = vadd.f32 %v234, %v242
        %v251 = vadd.f32 %v235, %v243
        %v252 = vmax.f32 %v228, %v236
        %v253 = vmax.f32 %v229, %v237
        %v254 = vmax.f32 %v230, %v238
        %v255 = vmax.f32 %v231, %v239
        %v256 = vmax.f32 %v232, %v240
        %v257 = vmax.f32 %v233, %v241
        %v258 = vmax.f32 %v234, %v242
        %v259 = vmax.f32 %v235, %v243
        %v260 = vld [vmem:[#allocation2] sm:$0xff]
        %v261 = vld [vmem:[#allocation2 + $0x8] sm:$0xff]
        %v262 = vld [vmem:[#allocation2 + $0x10] sm:$0xff]
        %v263 = vld [vmem:[#allocation2 + $0x18] sm:$0xff]
        %v264 = vld [vmem:[#allocation2 + $0x20] sm:$0xff]
        %v265 = vld [vmem:[#allocation2 + $0x28] sm:$0xff]
        %v266 = vld [vmem:[#allocation2 + $0x30] sm:$0xff]
        %v267 = vld [vmem:[#allocation2 + $0x38] sm:$0xff]
        %v268 = vadd.f32 %v260, %v244
        %v269 = vadd.f32 %v261, %v245
        %v270 = vadd.f32 %v262, %v246
        %v271 = vadd.f32 %v263, %v247
        %v272 = vadd.f32 %v264, %v248
        %v273 = vadd.f32 %v265, %v249
        %v274 = vadd.f32 %v266, %v250
        %v275 = vadd.f32 %v267, %v251
        %276 = vst [vmem:[#allocation2] sm:$0xff] %v268
        %277 = vst [vmem:[#allocation2 + $0x8] sm:$0xff] %v269
        %278 = vst [vmem:[#allocation2 + $0x10] sm:$0xff] %v270
        %279 = vst [vmem:[#allocation2 + $0x18] sm:$0xff] %v271
        %280 = vst [vmem:[#allocation2 + $0x20] sm:$0xff] %v272
        %281 = vst [vmem:[#allocation2 + $0x28] sm:$0xff] %v273
        %282 = vst [vmem:[#allocation2 + $0x30] sm:$0xff] %v274
        %283 = vst [vmem:[#allocation2 + $0x38] sm:$0xff] %v275
        %v284 = vld [vmem:[#allocation3] sm:$0xff]
        %v285 = vld [vmem:[#allocation3 + $0x8] sm:$0xff]
        %v286 = vld [vmem:[#allocation3 + $0x10] sm:$0xff]
        %v287 = vld [vmem:[#allocation3 + $0x18] sm:$0xff]
        %v288 = vld [vmem:[#allocation3 + $0x20] sm:$0xff]
        %v289 = vld [vmem:[#allocation3 + $0x28] sm:$0xff]
        %v290 = vld [vmem:[#allocation3 + $0x30] sm:$0xff]
        %v291 = vld [vmem:[#allocation3 + $0x38] sm:$0xff]
        %v292 = vmax.f32 %v284, %v252
        %v293 = vmax.f32 %v285, %v253
        %v294 = vmax.f32 %v286, %v254
        %v295 = vmax.f32 %v287, %v255
        %v296 = vmax.f32 %v288, %v256
        %v297 = vmax.f32 %v289, %v257
        %v298 = vmax.f32 %v290, %v258
        %v299 = vmax.f32 %v291, %v259
        %300 = vst [vmem:[#allocation3] sm:$0xff] %v292
        %301 = vst [vmem:[#allocation3 + $0x8] sm:$0xff] %v293
        %302 = vst [vmem:[#allocation3 + $0x10] sm:$0xff] %v294
        %303 = vst [vmem:[#allocation3 + $0x18] sm:$0xff] %v295
        %304 = vst [vmem:[#allocation3 + $0x20] sm:$0xff] %v296
        %305 = vst [vmem:[#allocation3 + $0x28] sm:$0xff] %v297
        %306 = vst [vmem:[#allocation3 + $0x30] sm:$0xff] %v298
        %307 = vst [vmem:[#allocation3 + $0x38] sm:$0xff] %v299
        // Predicated region
        $region41: #{tpu_custom_call.1} parent=31 // pred_check
          %p308 = pneg %p208
        $region42: #{tpu_custom_call.1} parent=31 // pred_check_branch
          %310 = sbr.rel (%p308) target = $region44
        $region43: #{tpu_custom_call.1} parent=31 // pred_region
          %v311 = vld [vmem:[#allocation2] sm:$0xff]
          %v312 = vld [vmem:[#allocation2 + $0x8] sm:$0xff]
          %v313 = vld [vmem:[#allocation2 + $0x10] sm:$0xff]
          %v314 = vld [vmem:[#allocation2 + $0x18] sm:$0xff]
          %v315 = vld [vmem:[#allocation2 + $0x20] sm:$0xff]
          %v316 = vld [vmem:[#allocation2 + $0x28] sm:$0xff]
          %v317 = vld [vmem:[#allocation2 + $0x30] sm:$0xff]
          %v318 = vld [vmem:[#allocation2 + $0x38] sm:$0xff]
          %319 = vadd.xlane.f32.xlu0 %v311
          %v320 = vpop.xlane.xlu0 %319
          %321 = vadd.xlane.f32.xlu0 %v312
          %v322 = vpop.xlane.xlu0 %321
          %323 = vadd.xlane.f32.xlu0 %v313
          %v324 = vpop.xlane.xlu0 %323
          %325 = vadd.xlane.f32.xlu0 %v314
          %v326 = vpop.xlane.xlu0 %325
          %327 = vadd.xlane.f32.xlu0 %v315
          %v328 = vpop.xlane.xlu0 %327
          %329 = vadd.xlane.f32.xlu0 %v316
          %v330 = vpop.xlane.xlu0 %329
          %331 = vadd.xlane.f32.xlu0 %v317
          %v332 = vpop.xlane.xlu0 %331
          %333 = vadd.xlane.f32.xlu0 %v318
          %v334 = vpop.xlane.xlu0 %333
          %v335 = vmul.f32 %v320, 0.00390625
          %v336 = vmul.f32 %v322, 0.00390625
          %v337 = vmul.f32 %v324, 0.00390625
          %v338 = vmul.f32 %v326, 0.00390625
          %v339 = vmul.f32 %v328, 0.00390625
          %v340 = vmul.f32 %v330, 0.00390625
          %v341 = vmul.f32 %v332, 0.00390625
          %v342 = vmul.f32 %v334, 0.00390625
          %v343 = vld [vmem:[#allocation3] sm:$0xff]
          %v344 = vld [vmem:[#allocation3 + $0x8] sm:$0xff]
          %v345 = vld [vmem:[#allocation3 + $0x10] sm:$0xff]
          %v346 = vld [vmem:[#allocation3 + $0x18] sm:$0xff]
          %v347 = vld [vmem:[#allocation3 + $0x20] sm:$0xff]
          %v348 = vld [vmem:[#allocation3 + $0x28] sm:$0xff]
          %v349 = vld [vmem:[#allocation3 + $0x30] sm:$0xff]
          %v350 = vld [vmem:[#allocation3 + $0x38] sm:$0xff]
          %351 = vmax.xlane.f32.xlu0 %v343
          %v352 = vpop.xlane.xlu0 %351
          %353 = vmax.xlane.f32.xlu0 %v344
          %v354 = vpop.xlane.xlu0 %353
          %355 = vmax.xlane.f32.xlu0 %v345
          %v356 = vpop.xlane.xlu0 %355
          %357 = vmax.xlane.f32.xlu0 %v346
          %v358 = vpop.xlane.xlu0 %357
          %359 = vmax.xlane.f32.xlu0 %v347
          %v360 = vpop.xlane.xlu0 %359
          %361 = vmax.xlane.f32.xlu0 %v348
          %v362 = vpop.xlane.xlu0 %361
          %363 = vmax.xlane.f32.xlu0 %v349
          %v364 = vpop.xlane.xlu0 %363
          %365 = vmax.xlane.f32.xlu0 %v350
          %v366 = vpop.xlane.xlu0 %365
          %v367 = vld [vmem:[%s1] sm:$0xff]
          %vm368 = vcmask 523264
          %v370 = vsel %vm368, %v367, 0
          %372 = vmatprep.subr.mxu0 0.0
          %373 = vmatpush1.msra.mxu0 0.0
          %374 = vmatprep.subr.mxu0 0.0
          %375 = vmatpush1.msra.mxu0 0.0
          %376 = vmatprep.subr.mxu0 0.0
          %377 = vmatpush1.msra.mxu0 0.0
          %378 = vmatprep.subr.mxu0 0.0
          %379 = vmatpush1.msra.mxu0 0.0
          %380 = vmatprep.subr.mxu0 0.0
          %381 = vmatpush1.msra.mxu0 0.0
          %382 = vmatprep.subr.mxu0 0.0
          %383 = vmatpush1.msra.mxu0 0.0
          %384 = vmatprep.subr.mxu0 0.0
          %385 = vmatpush1.msra.mxu0 0.0
          %386 = vmatprep.subr.mxu0 0.0
          %387 = vmatpush1.msra.mxu0 0.0
          %388 = vmatprep.subr.mxu0 0.0
          %389 = vmatpush1.msra.mxu0 %v342
          %390 = vmatprep.subr.mxu0 0.0
          %391 = vmatpush1.msra.mxu0 %v341
          %392 = vmatprep.subr.mxu0 0.0
          %393 = vmatpush1.msra.mxu0 %v340
          %394 = vmatprep.subr.mxu0 0.0
          %395 = vmatpush1.msra.mxu0 %v339
          %396 = vmatprep.subr.mxu0 0.0
          %397 = vmatpush1.msra.mxu0 %v338
          %398 = vmatprep.subr.mxu0 0.0
          %399 = vmatpush1.msra.mxu0 %v337
          %400 = vmatprep.subr.mxu0 0.0
          %401 = vmatpush1.msra.mxu0 %v336
          %402 = vmatprep.subr.mxu0 0.0
          %403 = vmatpush1.msra.mxu0 %v335
          %404 = vmatprep.subr.mxu0 0.0
          %405 = vmatpush2.msra.mxu0 0.0
          %406 = vmatprep.subr.mxu0 0.0
          %407 = vmatpush2.msra.mxu0 0.0
          %408 = vmatprep.subr.mxu0 0.0
          %409 = vmatpush2.msra.mxu0 0.0
          %410 = vmatprep.subr.mxu0 0.0
          %411 = vmatpush2.msra.mxu0 0.0
          %412 = vmatprep.subr.mxu0 0.0
          %413 = vmatpush2.msra.mxu0 0.0
          %414 = vmatprep.subr.mxu0 0.0
          %415 = vmatpush2.msra.mxu0 0.0
          %416 = vmatprep.subr.mxu0 0.0
          %417 = vmatpush2.msra.mxu0 0.0
          %418 = vmatprep.subr.mxu0 0.0
          %419 = vmatpush2.msra.mxu0 0.0
          %420 = vmatprep.subr.mxu0 0.0
          %421 = vmatpush2.msra.mxu0 0.0
          %422 = vmatprep.subr.mxu0 0.0
          %423 = vmatpush2.msra.mxu0 0.0
          %424 = vmatprep.subr.mxu0 0.0
          %425 = vmatpush2.msra.mxu0 0.0
          %426 = vmatprep.subr.mxu0 0.0
          %427 = vmatpush2.msra.mxu0 0.0
          %428 = vmatprep.subr.mxu0 0.0
          %429 = vmatpush2.msra.mxu0 0.0
          %430 = vmatprep.subr.mxu0 0.0
          %431 = vmatpush2.msra.mxu0 0.0
          %432 = vmatprep.subr.mxu0 0.0
          %433 = vmatpush2.msra.mxu0 0.0
          %434 = vmatprep.subr.mxu0 0.0
          %435 = vmatpush2.msra.mxu0 0.0
          %436 = vmatprep.mubr.f32.mxu0 0.0
          %437 = vmatmul.mubr.f32.gmra.mxu0 %v370
          %v438 = vpop.f32.mrf.mxu0
          %v439 = vadd.f32 0.0, %v438
          %v440 = vpop.f32.mrf.mxu0
          %441 = vdwg.mxu0
          %v442 = vmax.f32 %v439, 0.0
          %v443 = vld [vmem:[%s2] sm:$0xff]
          %v444 = vld [vmem:[%s2 + $0x8] sm:$0xff]
          %v445 = vld [vmem:[%s2 + $0x10] sm:$0xff]
          %v446 = vld [vmem:[%s2 + $0x18] sm:$0xff]
          %v447 = vld [vmem:[%s2 + $0x20] sm:$0xff]
          %v448 = vld [vmem:[%s2 + $0x28] sm:$0xff]
          %v449 = vld [vmem:[%s2 + $0x30] sm:$0xff]
          %v450 = vld [vmem:[%s2 + $0x38] sm:$0xff]
          %451 = vmatprep.subr.mxu0 0.0
          %452 = vmatpush1.msra.mxu0 0.0
          %453 = vmatprep.subr.mxu0 0.0
          %454 = vmatpush1.msra.mxu0 0.0
          %455 = vmatprep.subr.mxu0 0.0
          %456 = vmatpush1.msra.mxu0 0.0
          %457 = vmatprep.subr.mxu0 0.0
          %458 = vmatpush1.msra.mxu0 0.0
          %459 = vmatprep.subr.mxu0 0.0
          %460 = vmatpush1.msra.mxu0 0.0
          %461 = vmatprep.subr.mxu0 0.0
          %462 = vmatpush1.msra.mxu0 0.0
          %463 = vmatprep.subr.mxu0 0.0
          %464 = vmatpush1.msra.mxu0 0.0
          %465 = vmatprep.subr.mxu0 0.0
          %466 = vmatpush1.msra.mxu0 0.0
          %467 = vmatprep.subr.mxu0 0.0
          %468 = vmatpush1.msra.mxu0 %v366
          %469 = vmatprep.subr.mxu0 0.0
          %470 = vmatpush1.msra.mxu0 %v364
          %471 = vmatprep.subr.mxu0 0.0
          %472 = vmatpush1.msra.mxu0 %v362
          %473 = vmatprep.subr.mxu0 0.0
          %474 = vmatpush1.msra.mxu0 %v360
          %475 = vmatprep.subr.mxu0 0.0
          %476 = vmatpush1.msra.mxu0 %v358
          %477 = vmatprep.subr.mxu0 0.0
          %478 = vmatpush1.msra.mxu0 %v356
          %479 = vmatprep.subr.mxu0 0.0
          %480 = vmatpush1.msra.mxu0 %v354
          %481 = vmatprep.subr.mxu0 0.0
          %482 = vmatpush1.msra.mxu0 %v352
          %483 = vmatprep.subr.mxu0 0.0
          %484 = vmatpush2.msra.mxu0 0.0
          %485 = vmatprep.subr.mxu0 0.0
          %486 = vmatpush2.msra.mxu0 0.0
          %487 = vmatprep.subr.mxu0 0.0
          %488 = vmatpush2.msra.mxu0 0.0
          %489 = vmatprep.subr.mxu0 0.0
          %490 = vmatpush2.msra.mxu0 0.0
          %491 = vmatprep.subr.mxu0 0.0
          %492 = vmatpush2.msra.mxu0 0.0
          %493 = vmatprep.subr.mxu0 0.0
          %494 = vmatpush2.msra.mxu0 0.0
          %495 = vmatprep.subr.mxu0 0.0
          %496 = vmatpush2.msra.mxu0 0.0
          %497 = vmatprep.subr.mxu0 0.0
          %498 = vmatpush2.msra.mxu0 0.0
          %499 = vmatprep.subr.mxu0 0.0
          %500 = vmatpush2.msra.mxu0 0.0
          %501 = vmatprep.subr.mxu0 0.0
          %502 = vmatpush2.msra.mxu0 0.0
          %503 = vmatprep.subr.mxu0 0.0
          %504 = vmatpush2.msra.mxu0 0.0
          %505 = vmatprep.subr.mxu0 0.0
          %506 = vmatpush2.msra.mxu0 0.0
          %507 = vmatprep.subr.mxu0 0.0
          %508 = vmatpush2.msra.mxu0 0.0
          %509 = vmatprep.subr.mxu0 0.0
          %510 = vmatpush2.msra.mxu0 0.0
          %511 = vmatprep.subr.mxu0 0.0
          %512 = vmatpush2.msra.mxu0 0.0
          %513 = vmatprep.subr.mxu0 0.0
          %514 = vmatpush2.msra.mxu0 0.0
          %515 = vmatprep.mubr.f32.mxu0 0.0
          %516 = vmatmul.mubr.f32.gmra.mxu0 %v370
          %v517 = vpop.f32.mrf.mxu0
          %v518 = vadd.f32 0.0, %v517
          %v519 = vpop.f32.mrf.mxu0
          %520 = vdwg.mxu0
          %v521 = vmax.f32 %v518, 0.0
          %vm522 = vcmask 64512
          %v524 = vsel %vm522, %v443, 0
          %v527 = vsel %vm522, %v444, 0
          %v530 = vsel %vm522, %v445, 0
          %v533 = vsel %vm522, %v446, 0
          %v536 = vsel %vm522, %v447, 0
          %v539 = vsel %vm522, %v448, 0
          %v542 = vsel %vm522, %v449, 0
          %v545 = vsel %vm522, %v450, 0
          %547 = vmatprep.subr.mxu0 0.0
          %548 = vmatpush1.msra.mxu0 0.0
          %549 = vmatprep.subr.mxu0 0.0
          %550 = vmatpush1.msra.mxu0 0.0
          %551 = vmatprep.subr.mxu0 0.0
          %552 = vmatpush1.msra.mxu0 0.0
          %553 = vmatprep.subr.mxu0 0.0
          %554 = vmatpush1.msra.mxu0 0.0
          %555 = vmatprep.subr.mxu0 0.0
          %556 = vmatpush1.msra.mxu0 0.0
          %557 = vmatprep.subr.mxu0 0.0
          %558 = vmatpush1.msra.mxu0 0.0
          %559 = vmatprep.subr.mxu0 0.0
          %560 = vmatpush1.msra.mxu0 0.0
          %561 = vmatprep.subr.mxu0 0.0
          %562 = vmatpush1.msra.mxu0 0.0
          %563 = vmatprep.subr.mxu0 0.0
          %564 = vmatpush1.msra.mxu0 0.0
          %565 = vmatprep.subr.mxu0 0.0
          %566 = vmatpush1.msra.mxu0 0.0
          %567 = vmatprep.subr.mxu0 0.0
          %568 = vmatpush1.msra.mxu0 0.0
          %569 = vmatprep.subr.mxu0 0.0
          %570 = vmatpush1.msra.mxu0 0.0
          %571 = vmatprep.subr.mxu0 0.0
          %572 = vmatpush1.msra.mxu0 0.0
          %573 = vmatprep.subr.mxu0 0.0
          %574 = vmatpush1.msra.mxu0 0.0
          %575 = vmatprep.subr.mxu0 0.0
          %576 = vmatpush1.msra.mxu0 0.0
          %577 = vmatprep.subr.mxu0 0.0
          %578 = vmatpush1.msra.mxu0 %v521
          %579 = vmatprep.subr.mxu0 0.0
          %580 = vmatpush2.msra.mxu0 0.0
          %581 = vmatprep.subr.mxu0 0.0
          %582 = vmatpush2.msra.mxu0 0.0
          %583 = vmatprep.subr.mxu0 0.0
          %584 = vmatpush2.msra.mxu0 0.0
          %585 = vmatprep.subr.mxu0 0.0
          %586 = vmatpush2.msra.mxu0 0.0
          %587 = vmatprep.subr.mxu0 0.0
          %588 = vmatpush2.msra.mxu0 0.0
          %589 = vmatprep.subr.mxu0 0.0
          %590 = vmatpush2.msra.mxu0 0.0
          %591 = vmatprep.subr.mxu0 0.0
          %592 = vmatpush2.msra.mxu0 0.0
          %593 = vmatprep.subr.mxu0 0.0
          %594 = vmatpush2.msra.mxu0 0.0
          %595 = vmatprep.subr.mxu0 0.0
          %596 = vmatpush2.msra.mxu0 0.0
          %597 = vmatprep.subr.mxu0 0.0
          %598 = vmatpush2.msra.mxu0 0.0
          %599 = vmatprep.subr.mxu0 0.0
          %600 = vmatpush2.msra.mxu0 0.0
          %601 = vmatprep.subr.mxu0 0.0
          %602 = vmatpush2.msra.mxu0 0.0
          %603 = vmatprep.subr.mxu0 0.0
          %604 = vmatpush2.msra.mxu0 0.0
          %605 = vmatprep.subr.mxu0 0.0
          %606 = vmatpush2.msra.mxu0 0.0
          %607 = vmatprep.subr.mxu0 0.0
          %608 = vmatpush2.msra.mxu0 0.0
          %609 = vmatprep.subr.mxu0 0.0
          %610 = vmatpush2.msra.mxu0 0.0
          %611 = vmatprep.mubr.f32.mxu0 0.0
          %612 = vmatmul.mubr.f32.gmra.mxu0 %v524
          %v613 = vpop.f32.mrf.mxu0
          %v614 = vadd.f32 0.0, %v613
          %v615 = vpop.f32.mrf.mxu0
          %616 = vmatprep.mubr.f32.mxu0 0.0
          %617 = vmatmul.mubr.f32.gmra.mxu0 %v527
          %v618 = vpop.f32.mrf.mxu0
          %v619 = vadd.f32 0.0, %v618
          %v620 = vpop.f32.mrf.mxu0
          %621 = vmatprep.mubr.f32.mxu0 0.0
          %622 = vmatmul.mubr.f32.gmra.mxu0 %v530
          %v623 = vpop.f32.mrf.mxu0
          %v624 = vadd.f32 0.0, %v623
          %v625 = vpop.f32.mrf.mxu0
          %626 = vmatprep.mubr.f32.mxu0 0.0
          %627 = vmatmul.mubr.f32.gmra.mxu0 %v533
          %v628 = vpop.f32.mrf.mxu0
          %v629 = vadd.f32 0.0, %v628
          %v630 = vpop.f32.mrf.mxu0
          %631 = vmatprep.mubr.f32.mxu0 0.0
          %632 = vmatmul.mubr.f32.gmra.mxu0 %v536
          %v633 = vpop.f32.mrf.mxu0
          %v634 = vadd.f32 0.0, %v633
          %v635 = vpop.f32.mrf.mxu0
          %636 = vmatprep.mubr.f32.mxu0 0.0
          %637 = vmatmul.mubr.f32.gmra.mxu0 %v539
          %v638 = vpop.f32.mrf.mxu0
          %v639 = vadd.f32 0.0, %v638
          %v640 = vpop.f32.mrf.mxu0
          %641 = vmatprep.mubr.f32.mxu0 0.0
          %642 = vmatmul.mubr.f32.gmra.mxu0 %v542
          %v643 = vpop.f32.mrf.mxu0
          %v644 = vadd.f32 0.0, %v643
          %v645 = vpop.f32.mrf.mxu0
          %646 = vmatprep.mubr.f32.mxu0 0.0
          %647 = vmatmul.mubr.f32.gmra.mxu0 %v545
          %v648 = vpop.f32.mrf.mxu0
          %v649 = vadd.f32 0.0, %v648
          %v650 = vpop.f32.mrf.mxu0
          %651 = vdwg.mxu0
          %652 = vmatprep.subr.mxu0 0.0
          %653 = vmatpush1.msra.mxu0 0.0
          %654 = vmatprep.subr.mxu0 0.0
          %655 = vmatpush1.msra.mxu0 0.0
          %656 = vmatprep.subr.mxu0 0.0
          %657 = vmatpush1.msra.mxu0 0.0
          %658 = vmatprep.subr.mxu0 0.0
          %659 = vmatpush1.msra.mxu0 0.0
          %660 = vmatprep.subr.mxu0 0.0
          %661 = vmatpush1.msra.mxu0 0.0
          %662 = vmatprep.subr.mxu0 0.0
          %663 = vmatpush1.msra.mxu0 0.0
          %664 = vmatprep.subr.mxu0 0.0
          %665 = vmatpush1.msra.mxu0 0.0
          %666 = vmatprep.subr.mxu0 0.0
          %667 = vmatpush1.msra.mxu0 0.0
          %668 = vmatprep.subr.mxu0 0.0
          %669 = vmatpush1.msra.mxu0 0.0
          %670 = vmatprep.subr.mxu0 0.0
          %671 = vmatpush1.msra.mxu0 0.0
          %672 = vmatprep.subr.mxu0 0.0
          %673 = vmatpush1.msra.mxu0 0.0
          %674 = vmatprep.subr.mxu0 0.0
          %675 = vmatpush1.msra.mxu0 0.0
          %676 = vmatprep.subr.mxu0 0.0
          %677 = vmatpush1.msra.mxu0 0.0
          %678 = vmatprep.subr.mxu0 0.0
          %679 = vmatpush1.msra.mxu0 0.0
          %680 = vmatprep.subr.mxu0 0.0
          %681 = vmatpush1.msra.mxu0 0.0
          %682 = vmatprep.subr.mxu0 0.0
          %683 = vmatpush1.msra.mxu0 %v442
          %684 = vmatprep.subr.mxu0 0.0
          %685 = vmatpush2.msra.mxu0 0.0
          %686 = vmatprep.subr.mxu0 0.0
          %687 = vmatpush2.msra.mxu0 0.0
          %688 = vmatprep.subr.mxu0 0.0
          %689 = vmatpush2.msra.mxu0 0.0
          %690 = vmatprep.subr.mxu0 0.0
          %691 = vmatpush2.msra.mxu0 0.0
          %692 = vmatprep.subr.mxu0 0.0
          %693 = vmatpush2.msra.mxu0 0.0
          %694 = vmatprep.subr.mxu0 0.0
          %695 = vmatpush2.msra.mxu0 0.0
          %696 = vmatprep.subr.mxu0 0.0
          %697 = vmatpush2.msra.mxu0 0.0
          %698 = vmatprep.subr.mxu0 0.0
          %699 = vmatpush2.msra.mxu0 0.0
          %700 = vmatprep.subr.mxu0 0.0
          %701 = vmatpush2.msra.mxu0 0.0
          %702 = vmatprep.subr.mxu0 0.0
          %703 = vmatpush2.msra.mxu0 0.0
          %704 = vmatprep.subr.mxu0 0.0
          %705 = vmatpush2.msra.mxu0 0.0
          %706 = vmatprep.subr.mxu0 0.0
          %707 = vmatpush2.msra.mxu0 0.0
          %708 = vmatprep.subr.mxu0 0.0
          %709 = vmatpush2.msra.mxu0 0.0
          %710 = vmatprep.subr.mxu0 0.0
          %711 = vmatpush2.msra.mxu0 0.0
          %712 = vmatprep.subr.mxu0 0.0
          %713 = vmatpush2.msra.mxu0 0.0
          %714 = vmatprep.subr.mxu0 0.0
          %715 = vmatpush2.msra.mxu0 0.0
          %716 = vmatprep.mubr.f32.mxu0 0.0
          %717 = vmatmul.mubr.f32.gmra.mxu0 %v524
          %v718 = vpop.f32.mrf.mxu0
          %v719 = vadd.f32 %v614, %v718
          %v720 = vpop.f32.mrf.mxu0
          %721 = vmatprep.mubr.f32.mxu0 0.0
          %722 = vmatmul.mubr.f32.gmra.mxu0 %v527
          %v723 = vpop.f32.mrf.mxu0
          %v724 = vadd.f32 %v619, %v723
          %v725 = vpop.f32.mrf.mxu0
          %726 = vmatprep.mubr.f32.mxu0 0.0
          %727 = vmatmul.mubr.f32.gmra.mxu0 %v530
          %v728 = vpop.f32.mrf.mxu0
          %v729 = vadd.f32 %v624, %v728
          %v730 = vpop.f32.mrf.mxu0
          %731 = vmatprep.mubr.f32.mxu0 0.0
          %732 = vmatmul.mubr.f32.gmra.mxu0 %v533
          %v733 = vpop.f32.mrf.mxu0
          %v734 = vadd.f32 %v629, %v733
          %v735 = vpop.f32.mrf.mxu0
          %736 = vmatprep.mubr.f32.mxu0 0.0
          %737 = vmatmul.mubr.f32.gmra.mxu0 %v536
          %v738 = vpop.f32.mrf.mxu0
          %v739 = vadd.f32 %v634, %v738
          %v740 = vpop.f32.mrf.mxu0
          %741 = vmatprep.mubr.f32.mxu0 0.0
          %742 = vmatmul.mubr.f32.gmra.mxu0 %v539
          %v743 = vpop.f32.mrf.mxu0
          %v744 = vadd.f32 %v639, %v743
          %v745 = vpop.f32.mrf.mxu0
          %746 = vmatprep.mubr.f32.mxu0 0.0
          %747 = vmatmul.mubr.f32.gmra.mxu0 %v542
          %v748 = vpop.f32.mrf.mxu0
          %v749 = vadd.f32 %v644, %v748
          %v750 = vpop.f32.mrf.mxu0
          %751 = vmatprep.mubr.f32.mxu0 0.0
          %752 = vmatmul.mubr.f32.gmra.mxu0 %v545
          %v753 = vpop.f32.mrf.mxu0
          %v754 = vadd.f32 %v649, %v753
          %v755 = vpop.f32.mrf.mxu0
          %756 = vdwg.mxu0
          %v757 = vxor.u32 %v719, 2147483648
          %v758 = vxor.u32 %v724, 2147483648
          %v759 = vxor.u32 %v729, 2147483648
          %v760 = vxor.u32 %v734, 2147483648
          %v761 = vxor.u32 %v739, 2147483648
          %v762 = vxor.u32 %v744, 2147483648
          %v763 = vxor.u32 %v749, 2147483648
          %v764 = vxor.u32 %v754, 2147483648
          %v765 = vmul.f32 %v757, 1.442695
          %v766 = vpow.pop %v765
          %v767 = vmul.f32 %v758, 1.442695
          %v768 = vpow.pop %v767
          %v769 = vmul.f32 %v759, 1.442695
          %v770 = vpow.pop %v769
          %v771 = vmul.f32 %v760, 1.442695
          %v772 = vpow.pop %v771
          %v773 = vmul.f32 %v761, 1.442695
          %v774 = vpow.pop %v773
          %v775 = vmul.f32 %v762, 1.442695
          %v776 = vpow.pop %v775
          %v777 = vmul.f32 %v763, 1.442695
          %v778 = vpow.pop %v777
          %v779 = vmul.f32 %v764, 1.442695
          %v780 = vpow.pop %v779
          %v781 = vadd.f32 %v766, 1.0
          %v782 = vadd.f32 %v768, 1.0
          %v783 = vadd.f32 %v770, 1.0
          %v784 = vadd.f32 %v772, 1.0
          %v785 = vadd.f32 %v774, 1.0
          %v786 = vadd.f32 %v776, 1.0
          %v787 = vadd.f32 %v778, 1.0
          %v788 = vadd.f32 %v780, 1.0
          %v789 = vrcp.pop %v781
          %v790 = vmul.f32 1.0, %v789
          %v791 = vrcp.pop %v782
          %v792 = vmul.f32 1.0, %v791
          %v793 = vrcp.pop %v783
          %v794 = vmul.f32 1.0, %v793
          %v795 = vrcp.pop %v784
          %v796 = vmul.f32 1.0, %v795
          %v797 = vrcp.pop %v785
          %v798 = vmul.f32 1.0, %v797
          %v799 = vrcp.pop %v786
          %v800 = vmul.f32 1.0, %v799
          %v801 = vrcp.pop %v787
          %v802 = vmul.f32 1.0, %v801
          %v803 = vrcp.pop %v788
          %v804 = vmul.f32 1.0, %v803
          %vm805 = vcmask 7168
          %806 = vst.msk [vmem:[%s207] sm:$0xff] %vm805, %v790
          %807 = vst.msk [vmem:[%s207 + $0x8] sm:$0xff] %vm805, %v792
          %808 = vst.msk [vmem:[%s207 + $0x10] sm:$0xff] %vm805, %v794
          %809 = vst.msk [vmem:[%s207 + $0x18] sm:$0xff] %vm805, %v796
          %810 = vst.msk [vmem:[%s207 + $0x20] sm:$0xff] %vm805, %v798
          %811 = vst.msk [vmem:[%s207 + $0x28] sm:$0xff] %vm805, %v800
          %812 = vst.msk [vmem:[%s207 + $0x30] sm:$0xff] %vm805, %v802
          %813 = vst.msk [vmem:[%s207 + $0x38] sm:$0xff] %vm805, %v804
        $region44: #{tpu_custom_call.1} parent=31 // pred_fallthru
          _
        %p814 = scmp.lt.s32.totalorder %s21, 1
        %s815 = scalar_select %p814, %s21, 1
        %s816 = smul.addr %s815, 8
        %s817 = smul.addr %s816, 8
        %s818 = scalar_lea.vmem %s3, %s817
        // Predicated region
        $region45: #{tpu_custom_call.1} parent=31 // pred_check
          %p819 = pneg %p117
        $region46: #{tpu_custom_call.1} parent=31 // pred_check_branch
          %821 = sbr.rel (%p819) target = $region48
        $region47: #{tpu_custom_call.1} parent=31 // pred_region
          _
        $region48: #{tpu_custom_call.1} parent=31 // pred_fallthru
          _
      $region32: #{tpu_custom_call.1} parent=5 // pred_fallthru
        _
      %p822 = scmp.le.s32.totalorder 2, %s12
      // Predicated region
      $region49: #{tpu_custom_call.1} parent=5 // pred_check
        %p823 = pneg %p822
      $region50: #{tpu_custom_call.1} parent=5 // pred_check_branch
        %825 = sbr.rel (%p823) target = $region52
      $region51: #{tpu_custom_call.1} parent=5 // pred_region
        %s826 = ssub.s32 %s12, 2
        // Predicated region
        $region53: #{tpu_custom_call.1} parent=51 // pred_check
          %p827 = pneg %p123
        $region54: #{tpu_custom_call.1} parent=51 // pred_check_branch
          %829 = sbr.rel (%p827) target = $region56
        $region55: #{tpu_custom_call.1} parent=51 // pred_region
          %p830 = scmp.lt.s32.totalorder %s23, 1
          %s831 = scalar_select %p830, %s23, 1
          %s832 = smul.addr %s831, 8
          %s833 = smul.addr %s832, 8
          %s834 = scalar_lea.vmem %s3, %s833
        $region56: #{tpu_custom_call.1} parent=51 // pred_fallthru
          _
      $region52: #{tpu_custom_call.1} parent=5 // pred_fallthru
        _
    $region6: #{tpu_custom_call.1} parent=1 // loop_footer
      %s16 = sadd.s32 1, %s12
    $region7: #{tpu_custom_call.1} parent=1 // loop_footer_branch
      %11 = sbr.rel target = $region3
    $region8: #{tpu_custom_call.1} parent=1 // loop_exit
      _
    %835 = vsyncpa [#allocation5], 1
    %s836 = scalar_lea.sflag [#allocation5], 1
    %837 = vsyncpa %s836, 1

</llo_original>
